<compile_context>
chip_gen: v6e
topology: v6e:2x2x1
jax: 0.10.0
libtpu: 0.0.40
codegen_flags: <defaults>
</compile_context>

<pallas_src>
import functools

import jax
import jax.numpy as jnp
from jax.experimental import pallas as pl
from jax.experimental.pallas import tpu as pltpu

BN_EPS = 1e-5


def _se_basic_block_kernel(B, C, L, Lpad, r,
                           x_ref, w1_ref, g1_ref, be1_ref,
                           w2_ref, g2_ref, be2_ref,
                           wse1_ref, wse2_ref, o_ref):
    f32 = jnp.float32
    inv_n = 1.0 / float(B * L)        # true element count per channel for BN stats
    inv_l = 1.0 / float(L)            # true length for the SE average pool

    x = x_ref[...]                    # (B, C, Lpad) f32, zeros on padded lanes

    # Lane-validity mask (1 on the first L lanes, 0 on padding), built in-kernel.
    lane = jax.lax.broadcasted_iota(jnp.int32, (1, 1, Lpad), 2)
    mask = (lane < L).astype(f32)     # (1, 1, Lpad)

    # ---- conv1: pointwise Conv1d == per-batch channel matmul on the MXU.
    # Conv bias is omitted: a per-channel constant cancels exactly in
    # training-mode BN (mean shifts by the same constant).
    w1b = jnp.broadcast_to(w1_ref[...], (B, C, C))
    h1 = jnp.einsum('bpc,bcl->bpl', w1b, x, preferred_element_type=f32)   # (B,C,Lpad)

    # ---- bn1: fused one-sweep sum / sum-of-squares (padded lanes of h1 are exact 0).
    p1 = jnp.sum(h1, axis=2, keepdims=True)            # (B,C,1) lane reduce
    q1 = jnp.sum(h1 * h1, axis=2, keepdims=True)       # (B,C,1)
    s1 = jnp.sum(p1, axis=0, keepdims=True)            # (1,C,1) batch reduce
    s2 = jnp.sum(q1, axis=0, keepdims=True)
    m1 = s1 * inv_n
    v1 = s2 * inv_n - m1 * m1
    scale1 = g1_ref[...] * jax.lax.rsqrt(v1 + BN_EPS)   # (1,C,1) folded BN affine
    shift1 = be1_ref[...] - m1 * scale1

    # relu, then re-zero padded lanes so bn2 stats / SE pooling need no masking.
    a1 = jnp.maximum(h1 * scale1 + shift1, 0.0) * mask  # (B,C,Lpad)

    # ---- conv2: pointwise Conv1d (bias cancels in BN2 as above).
    w2b = jnp.broadcast_to(w2_ref[...], (B, C, C))
    h2 = jnp.einsum('bpc,bcl->bpl', w2b, a1, preferred_element_type=f32)  # 0 on padded lanes

    # ---- bn2 stats (affine folded into per-channel scale/shift; applied fused with SE gate).
    p2 = jnp.sum(h2, axis=2, keepdims=True)             # (B,C,1) — reused for SE pooling
    q2 = jnp.sum(h2 * h2, axis=2, keepdims=True)
    t1 = jnp.sum(p2, axis=0, keepdims=True)             # (1,C,1)
    t2 = jnp.sum(q2, axis=0, keepdims=True)
    m2 = t1 * inv_n
    v2 = t2 * inv_n - m2 * m2
    scale2 = g2_ref[...] * jax.lax.rsqrt(v2 + BN_EPS)    # (1,C,1)
    shift2 = be2_ref[...] - m2 * scale2

    # ---- SE layer, batched over all B (no per-batch loop, no narrow stores).
    # AdaptiveAvgPool1d(1) of the bn2 output, derived from the already-computed lane sums.
    pooled = p2 * (scale2 * inv_l) + shift2              # (B,C,1)
    wse1b = jnp.broadcast_to(wse1_ref[...], (B, r, C))
    wse2b = jnp.broadcast_to(wse2_ref[...], (B, C, r))
    z = jnp.maximum(jnp.einsum('brc,bcx->brx', wse1b, pooled,
                               preferred_element_type=f32), 0.0)          # (B,r,1)
    t = jnp.einsum('bcr,brx->bcx', wse2b, z, preferred_element_type=f32)  # (B,C,1)
    gate = jax.nn.sigmoid(t)                             # EUP sigmoid, (B,C,1)

    # ---- fused: bn2 affine * SE gate + residual + final ReLU, one lane-dense store.
    gs = scale2 * gate                                   # (B,C,1)
    gb = shift2 * gate
    o_ref[...] = jnp.maximum(h2 * gs + gb + x, 0.0)      # (B,C,Lpad) full-tile store


def se_basic_block(x, params):
    """x: (B, C, L) float32 (PyTorch NCL). Returns (B, C, L). No HBM transposes."""
    B, C, L = x.shape
    Lpad = ((L + 127) // 128) * 128                      # lane-dense working width
    r = params["wse1"].shape[0]

    x_p = x if Lpad == L else jnp.pad(x, ((0, 0), (0, 0), (0, Lpad - L)))
    g1 = params["g1"].reshape(1, C, 1)
    be1 = params["be1"].reshape(1, C, 1)
    g2 = params["g2"].reshape(1, C, 1)
    be2 = params["be2"].reshape(1, C, 1)

    args = (x_p, params["w1"], g1, be1, params["w2"], g2, be2,
            params["wse1"], params["wse2"])
    vmem = pl.BlockSpec(memory_space=pltpu.MemorySpace.VMEM)  # whole-array VMEM blocks

    out = pl.pallas_call(
        functools.partial(_se_basic_block_kernel, B, C, L, Lpad, r),
        out_shape=jax.ShapeDtypeStruct((B, C, Lpad), jnp.float32),
        in_specs=[vmem] * len(args),
        out_specs=vmem,
    )(*args)
    return out[:, :, :L]


def init_params(key, channels, reduction=16):
    ks = jax.random.split(key, 6)
    hid = channels // reduction
    assert hid >= 1, "channels must be >= reduction"
    s = 1.0 / jnp.sqrt(channels)
    return {
        "w1": jax.random.uniform(ks[0], (channels, channels), jnp.float32, -s, s),
        "b1": jax.random.uniform(ks[1], (channels, 1), jnp.float32, -s, s),
        "g1": jnp.ones((channels, 1), jnp.float32),
        "be1": jnp.zeros((channels, 1), jnp.float32),
        "w2": jax.random.uniform(ks[2], (channels, channels), jnp.float32, -s, s),
        "b2": jax.random.uniform(ks[3], (channels, 1), jnp.float32, -s, s),
        "g2": jnp.ones((channels, 1), jnp.float32),
        "be2": jnp.zeros((channels, 1), jnp.float32),
        "wse1": jax.random.uniform(ks[4], (hid, channels), jnp.float32, -s, s),
        "wse2": jax.random.uniform(ks[5], (channels, hid), jnp.float32,
                                   -1.0 / jnp.sqrt(hid), 1.0 / jnp.sqrt(hid)),
    }


def reference(x, p):
    """Pure-JAX reference mirroring the PyTorch forward (training-mode BN, biases applied)."""
    def bn(h, g, be):
        m = h.mean(axis=(0, 2), keepdims=True)
        v = ((h - m) ** 2).mean(axis=(0, 2), keepdims=True)
        return (h - m) / jnp.sqrt(v + BN_EPS) * g.reshape(1, -1, 1) + be.reshape(1, -1, 1)
    h = jnp.einsum("pc,bcl->bpl", p["w1"], x) + p["b1"].reshape(1, -1, 1)
    h = jnp.maximum(bn(h, p["g1"], p["be1"]), 0.0)
    h = jnp.einsum("pc,bcl->bpl", p["w2"], h) + p["b2"].reshape(1, -1, 1)
    h = bn(h, p["g2"], p["be2"])
    s = h.mean(axis=2)                                        # (B, C)
    z = jnp.maximum(s @ p["wse1"].T, 0.0)
    y = 1.0 / (1.0 + jnp.exp(-(z @ p["wse2"].T)))
    h = h * y[:, :, None]
    return jnp.maximum(h + x, 0.0)


if __name__ == "__main__":
    B, C, L = 2, 32, 16          # inplanes == planes == 32 (needed since downsample=None)
    key = jax.random.PRNGKey(0)
    kx, kp = jax.random.split(key)
    x = jax.random.normal(kx, (B, C, L), jnp.float32)
    params = init_params(kp, C, reduction=16)

    out = jax.block_until_ready(se_basic_block(x, params))

    ref = reference(x, params)
    assert out.shape == (B, C, L)
    assert jnp.max(jnp.abs(out - ref)) < 1e-4
    print("KERNEL_OK")
</pallas_src>

<mosaic_0001>
module attributes {stable_mosaic.version = 11 : i64} {
  func.func @_se_basic_block_kernel(%arg0: memref<2x32x128xf32, #tpu.memory_space<vmem>>, %arg1: memref<32x32xf32, #tpu.memory_space<vmem>>, %arg2: memref<1x32x1xf32, #tpu.memory_space<vmem>>, %arg3: memref<1x32x1xf32, #tpu.memory_space<vmem>>, %arg4: memref<32x32xf32, #tpu.memory_space<vmem>>, %arg5: memref<1x32x1xf32, #tpu.memory_space<vmem>>, %arg6: memref<1x32x1xf32, #tpu.memory_space<vmem>>, %arg7: memref<2x32xf32, #tpu.memory_space<vmem>>, %arg8: memref<32x2xf32, #tpu.memory_space<vmem>>, %arg9: memref<2x32x128xf32, #tpu.memory_space<vmem>>) attributes {dimension_semantics = [], scalar_prefetch = 0 : i64, scratch_operands = 0 : i64, tpu.core_type = #tpu.core_type<tc>} {
    %c0 = arith.constant 0 : index
    %c0_0 = arith.constant 0 : index
    %c0_1 = arith.constant 0 : index
    %0 = vector.load %arg0[%c0, %c0_0, %c0_1] : memref<2x32x128xf32, #tpu.memory_space<vmem>>, vector<2x32x128xf32>
    %1 = tpu.iota {dimensions = array<i32: 2>} : vector<1x1x128xi32>
    %c16_i32 = arith.constant 16 : i32
    %2 = vector.broadcast %c16_i32 : i32 to vector<1x1x128xi32>
    %3 = arith.cmpi slt, %1, %2 : vector<1x1x128xi32>
    %4 = arith.extui %3 : vector<1x1x128xi1> to vector<1x1x128xi32>
    %5 = arith.sitofp %4 : vector<1x1x128xi32> to vector<1x1x128xf32>
    %c0_2 = arith.constant 0 : index
    %c0_3 = arith.constant 0 : index
    %6 = vector.load %arg1[%c0_2, %c0_3] : memref<32x32xf32, #tpu.memory_space<vmem>>, vector<32x32xf32>
    %7 = vector.shape_cast %6 : vector<32x32xf32> to vector<1x32x32xf32>
    %8 = vector.broadcast %7 : vector<1x32x32xf32> to vector<2x32x32xf32>
    "tpu.trace_start"() <{level = 10 : i32, message = "bpc,bcl->bpl"}> : () -> ()
    %cst = arith.constant dense<0.000000e+00> : vector<2x32x128xf32>
    %9 = tpu.matmul %8, %0, %cst {dimension_numbers = #tpu.dot_dimension_numbers<[2], [1], [1], [2], [0, 0, 0, 1, 1, 2], [0], [0]>} : vector<2x32x32xf32>, vector<2x32x128xf32>, vector<2x32x128xf32> -> vector<2x32x128xf32>
    "tpu.trace_stop"() : () -> ()
    %cst_4 = arith.constant dense<0.000000e+00> : vector<2x32xf32>
    %10 = vector.multi_reduction <add>, %9, %cst_4 [2] : vector<2x32x128xf32> to vector<2x32xf32>
    %11 = vector.shape_cast %10 : vector<2x32xf32> to vector<2x32x1xf32>
    %12 = arith.mulf %9, %9 : vector<2x32x128xf32>
    %cst_5 = arith.constant dense<0.000000e+00> : vector<2x32xf32>
    %13 = vector.multi_reduction <add>, %12, %cst_5 [2] : vector<2x32x128xf32> to vector<2x32xf32>
    %14 = vector.shape_cast %13 : vector<2x32xf32> to vector<2x32x1xf32>
    %cst_6 = arith.constant dense<0.000000e+00> : vector<32x1xf32>
    %15 = vector.multi_reduction <add>, %11, %cst_6 [0] : vector<2x32x1xf32> to vector<32x1xf32>
    %16 = vector.shape_cast %15 : vector<32x1xf32> to vector<1x32x1xf32>
    %cst_7 = arith.constant dense<0.000000e+00> : vector<32x1xf32>
    %17 = vector.multi_reduction <add>, %14, %cst_7 [0] : vector<2x32x1xf32> to vector<32x1xf32>
    %18 = vector.shape_cast %17 : vector<32x1xf32> to vector<1x32x1xf32>
    %cst_8 = arith.constant 3.125000e-02 : f32
    %19 = vector.broadcast %cst_8 : f32 to vector<1x32x1xf32>
    %20 = arith.mulf %16, %19 : vector<1x32x1xf32>
    %cst_9 = arith.constant 3.125000e-02 : f32
    %21 = vector.broadcast %cst_9 : f32 to vector<1x32x1xf32>
    %22 = arith.mulf %18, %21 : vector<1x32x1xf32>
    %23 = arith.mulf %20, %20 : vector<1x32x1xf32>
    %24 = arith.subf %22, %23 : vector<1x32x1xf32>
    %c0_10 = arith.constant 0 : index
    %c0_11 = arith.constant 0 : index
    %c0_12 = arith.constant 0 : index
    %25 = vector.load %arg2[%c0_10, %c0_11, %c0_12] : memref<1x32x1xf32, #tpu.memory_space<vmem>>, vector<1x32x1xf32>
    %cst_13 = arith.constant 9.99999974E-6 : f32
    %26 = vector.broadcast %cst_13 : f32 to vector<1x32x1xf32>
    %27 = arith.addf %24, %26 : vector<1x32x1xf32>
    %28 = math.rsqrt %27 : vector<1x32x1xf32>
    %29 = arith.mulf %25, %28 : vector<1x32x1xf32>
    %c0_14 = arith.constant 0 : index
    %c0_15 = arith.constant 0 : index
    %c0_16 = arith.constant 0 : index
    %30 = vector.load %arg3[%c0_14, %c0_15, %c0_16] : memref<1x32x1xf32, #tpu.memory_space<vmem>>, vector<1x32x1xf32>
    %31 = arith.mulf %20, %29 : vector<1x32x1xf32>
    %32 = arith.subf %30, %31 : vector<1x32x1xf32>
    %33 = vector.broadcast %29 : vector<1x32x1xf32> to vector<2x32x128xf32>
    %34 = arith.mulf %9, %33 : vector<2x32x128xf32>
    %35 = vector.broadcast %32 : vector<1x32x1xf32> to vector<2x32x128xf32>
    %36 = arith.addf %34, %35 : vector<2x32x128xf32>
    %cst_17 = arith.constant 0.000000e+00 : f32
    %37 = vector.broadcast %cst_17 : f32 to vector<2x32x128xf32>
    %38 = arith.maximumf %36, %37 : vector<2x32x128xf32>
    %39 = vector.broadcast %5 : vector<1x1x128xf32> to vector<2x32x128xf32>
    %40 = arith.mulf %38, %39 : vector<2x32x128xf32>
    %c0_18 = arith.constant 0 : index
    %c0_19 = arith.constant 0 : index
    %41 = vector.load %arg4[%c0_18, %c0_19] : memref<32x32xf32, #tpu.memory_space<vmem>>, vector<32x32xf32>
    %42 = vector.shape_cast %41 : vector<32x32xf32> to vector<1x32x32xf32>
    %43 = vector.broadcast %42 : vector<1x32x32xf32> to vector<2x32x32xf32>
    "tpu.trace_start"() <{level = 10 : i32, message = "bpc,bcl->bpl"}> : () -> ()
    %cst_20 = arith.constant dense<0.000000e+00> : vector<2x32x128xf32>
    %44 = tpu.matmul %43, %40, %cst_20 {dimension_numbers = #tpu.dot_dimension_numbers<[2], [1], [1], [2], [0, 0, 0, 1, 1, 2], [0], [0]>} : vector<2x32x32xf32>, vector<2x32x128xf32>, vector<2x32x128xf32> -> vector<2x32x128xf32>
    "tpu.trace_stop"() : () -> ()
    %cst_21 = arith.constant dense<0.000000e+00> : vector<2x32xf32>
    %45 = vector.multi_reduction <add>, %44, %cst_21 [2] : vector<2x32x128xf32> to vector<2x32xf32>
    %46 = vector.shape_cast %45 : vector<2x32xf32> to vector<2x32x1xf32>
    %47 = arith.mulf %44, %44 : vector<2x32x128xf32>
    %cst_22 = arith.constant dense<0.000000e+00> : vector<2x32xf32>
    %48 = vector.multi_reduction <add>, %47, %cst_22 [2] : vector<2x32x128xf32> to vector<2x32xf32>
    %49 = vector.shape_cast %48 : vector<2x32xf32> to vector<2x32x1xf32>
    %cst_23 = arith.constant dense<0.000000e+00> : vector<32x1xf32>
    %50 = vector.multi_reduction <add>, %46, %cst_23 [0] : vector<2x32x1xf32> to vector<32x1xf32>
    %51 = vector.shape_cast %50 : vector<32x1xf32> to vector<1x32x1xf32>
    %cst_24 = arith.constant dense<0.000000e+00> : vector<32x1xf32>
    %52 = vector.multi_reduction <add>, %49, %cst_24 [0] : vector<2x32x1xf32> to vector<32x1xf32>
    %53 = vector.shape_cast %52 : vector<32x1xf32> to vector<1x32x1xf32>
    %cst_25 = arith.constant 3.125000e-02 : f32
    %54 = vector.broadcast %cst_25 : f32 to vector<1x32x1xf32>
    %55 = arith.mulf %51, %54 : vector<1x32x1xf32>
    %cst_26 = arith.constant 3.125000e-02 : f32
    %56 = vector.broadcast %cst_26 : f32 to vector<1x32x1xf32>
    %57 = arith.mulf %53, %56 : vector<1x32x1xf32>
    %58 = arith.mulf %55, %55 : vector<1x32x1xf32>
    %59 = arith.subf %57, %58 : vector<1x32x1xf32>
    %c0_27 = arith.constant 0 : index
    %c0_28 = arith.constant 0 : index
    %c0_29 = arith.constant 0 : index
    %60 = vector.load %arg5[%c0_27, %c0_28, %c0_29] : memref<1x32x1xf32, #tpu.memory_space<vmem>>, vector<1x32x1xf32>
    %cst_30 = arith.constant 9.99999974E-6 : f32
    %61 = vector.broadcast %cst_30 : f32 to vector<1x32x1xf32>
    %62 = arith.addf %59, %61 : vector<1x32x1xf32>
    %63 = math.rsqrt %62 : vector<1x32x1xf32>
    %64 = arith.mulf %60, %63 : vector<1x32x1xf32>
    %c0_31 = arith.constant 0 : index
    %c0_32 = arith.constant 0 : index
    %c0_33 = arith.constant 0 : index
    %65 = vector.load %arg6[%c0_31, %c0_32, %c0_33] : memref<1x32x1xf32, #tpu.memory_space<vmem>>, vector<1x32x1xf32>
    %66 = arith.mulf %55, %64 : vector<1x32x1xf32>
    %67 = arith.subf %65, %66 : vector<1x32x1xf32>
    %cst_34 = arith.constant 6.250000e-02 : f32
    %68 = vector.broadcast %cst_34 : f32 to vector<1x32x1xf32>
    %69 = arith.mulf %64, %68 : vector<1x32x1xf32>
    %70 = vector.broadcast %69 : vector<1x32x1xf32> to vector<2x32x1xf32>
    %71 = arith.mulf %46, %70 : vector<2x32x1xf32>
    %72 = vector.broadcast %67 : vector<1x32x1xf32> to vector<2x32x1xf32>
    %73 = arith.addf %71, %72 : vector<2x32x1xf32>
    %c0_35 = arith.constant 0 : index
    %c0_36 = arith.constant 0 : index
    %74 = vector.load %arg7[%c0_35, %c0_36] : memref<2x32xf32, #tpu.memory_space<vmem>>, vector<2x32xf32>
    %75 = vector.shape_cast %74 : vector<2x32xf32> to vector<1x2x32xf32>
    %76 = vector.broadcast %75 : vector<1x2x32xf32> to vector<2x2x32xf32>
    %c0_37 = arith.constant 0 : index
    %c0_38 = arith.constant 0 : index
    %77 = vector.load %arg8[%c0_37, %c0_38] : memref<32x2xf32, #tpu.memory_space<vmem>>, vector<32x2xf32>
    %78 = vector.shape_cast %77 : vector<32x2xf32> to vector<1x32x2xf32>
    %79 = vector.broadcast %78 : vector<1x32x2xf32> to vector<2x32x2xf32>
    "tpu.trace_start"() <{level = 10 : i32, message = "brc,bcx->brx"}> : () -> ()
    %cst_39 = arith.constant dense<0.000000e+00> : vector<2x2x1xf32>
    %80 = tpu.matmul %76, %73, %cst_39 {dimension_numbers = #tpu.dot_dimension_numbers<[2], [1], [1], [2], [0, 0, 0, 1, 1, 2], [0], [0]>} : vector<2x2x32xf32>, vector<2x32x1xf32>, vector<2x2x1xf32> -> vector<2x2x1xf32>
    "tpu.trace_stop"() : () -> ()
    %cst_40 = arith.constant 0.000000e+00 : f32
    %81 = vector.broadcast %cst_40 : f32 to vector<2x2x1xf32>
    %82 = arith.maximumf %80, %81 : vector<2x2x1xf32>
    "tpu.trace_start"() <{level = 10 : i32, message = "bcr,brx->bcx"}> : () -> ()
    %cst_41 = arith.constant dense<0.000000e+00> : vector<2x32x1xf32>
    %83 = tpu.matmul %79, %82, %cst_41 {dimension_numbers = #tpu.dot_dimension_numbers<[2], [1], [1], [2], [0, 0, 0, 1, 1, 2], [0], [0]>} : vector<2x32x2xf32>, vector<2x2x1xf32>, vector<2x32x1xf32> -> vector<2x32x1xf32>
    "tpu.trace_stop"() : () -> ()
    %84 = arith.negf %83 : vector<2x32x1xf32>
    %85 = math.exp %84 : vector<2x32x1xf32>
    %cst_42 = arith.constant 1.000000e+00 : f32
    %86 = vector.broadcast %cst_42 : f32 to vector<2x32x1xf32>
    %87 = arith.addf %86, %85 : vector<2x32x1xf32>
    %88 = arith.divf %86, %87 : vector<2x32x1xf32>
    %89 = vector.broadcast %64 : vector<1x32x1xf32> to vector<2x32x1xf32>
    %90 = arith.mulf %89, %88 : vector<2x32x1xf32>
    %91 = vector.broadcast %67 : vector<1x32x1xf32> to vector<2x32x1xf32>
    %92 = arith.mulf %91, %88 : vector<2x32x1xf32>
    %93 = vector.broadcast %90 : vector<2x32x1xf32> to vector<2x32x128xf32>
    %94 = arith.mulf %44, %93 : vector<2x32x128xf32>
    %95 = vector.broadcast %92 : vector<2x32x1xf32> to vector<2x32x128xf32>
    %96 = arith.addf %94, %95 : vector<2x32x128xf32>
    %97 = arith.addf %96, %0 : vector<2x32x128xf32>
    %cst_43 = arith.constant 0.000000e+00 : f32
    %98 = vector.broadcast %cst_43 : f32 to vector<2x32x128xf32>
    %99 = arith.maximumf %97, %98 : vector<2x32x128xf32>
    %c0_44 = arith.constant 0 : index
    %c0_45 = arith.constant 0 : index
    %c0_46 = arith.constant 0 : index
    %100 = vector.load %arg9[%c0_44, %c0_45, %c0_46] : memref<2x32x128xf32, #tpu.memory_space<vmem>>, vector<2x32x128xf32>
    tpu.vector_store %arg9[%c0_44, %c0_45, %c0_46], %99 {strides = array<i32>} : memref<2x32x128xf32, #tpu.memory_space<vmem>>, vector<2x32x128xf32>,
    return
  }
}

</mosaic_0001>

<llo_original>
// kernel: tpu_custom_call.1
$region0: #{tpu_custom_call.1}
  #allocation0 [shape = 'u32[]', space=smem, size = 0x4, offset = 0x4, fixed_abs, tag = 'smem constant byte address 0x4 - core index']
  #allocation1 [shape = 'u32[144,128]{1,0:T(1,128)}', space=vmem, size = 0x12000, scoped, tag = 'internal scratch']
  %s0 = inlined_call_operand.vmem [shape: f32[2,32,128], index: 0, kind: input, shape index: {}]
  %s1 = inlined_call_operand.vmem [shape: f32[32,32], index: 1, kind: input, shape index: {}]
  %s2 = inlined_call_operand.vmem [shape: f32[1,32,1], index: 2, kind: input, shape index: {}]
  %s3 = inlined_call_operand.vmem [shape: f32[1,32,1], index: 3, kind: input, shape index: {}]
  %s4 = inlined_call_operand.vmem [shape: f32[32,32], index: 4, kind: input, shape index: {}]
  %s5 = inlined_call_operand.vmem [shape: f32[1,32,1], index: 5, kind: input, shape index: {}]
  %s6 = inlined_call_operand.vmem [shape: f32[1,32,1], index: 6, kind: input, shape index: {}]
  %s7 = inlined_call_operand.vmem [shape: f32[2,32], index: 7, kind: input, shape index: {}]
  %s8 = inlined_call_operand.vmem [shape: f32[32,2], index: 8, kind: input, shape index: {}]
  %s9 = inlined_call_operand.hbm [shape: f32[2,32,128], index: 9, kind: output, shape index: {}]
  %s10 = sld [smem:[#allocation0]]
  $region46: #{tpu_custom_call.1} parent=0
    _
  %s12 = ssub.s32 1, %s10
  %s13 = scalar_select 0, %s12, %s10
  $region1: #{tpu_custom_call.1} parent=0
    #allocation2 [shape = 'u8[32768]{0}', space=vmem, size = 0x8000, scoped, tag = 'output window, operand 0, single buffered']
    #allocation3 [shape = 's32[1]{0}', space=sflag, size = 0x4, scoped, tag = 'scoped memory for tpu_custom_call.1']
    %14 = vsyncpa [#allocation3], 0
    // Predicated region
    $region2: #{tpu_custom_call.1} parent=1 // pred_check
      _
    $region3: #{tpu_custom_call.1} parent=1 // pred_check_branch
      %16 = sbr.rel (0) target = $region5
    $region4: #{tpu_custom_call.1} parent=1 // pred_region
      _
    $region5: #{tpu_custom_call.1} parent=1 // pred_fallthru
      _
    // Predicated region
    $region6: #{tpu_custom_call.1} parent=1 // pred_check
      _
    $region7: #{tpu_custom_call.1} parent=1 // pred_check_branch
      %18 = sbr.rel (0) target = $region9
    $region8: #{tpu_custom_call.1} parent=1 // pred_region
      _
    $region9: #{tpu_custom_call.1} parent=1 // pred_fallthru
      _
    // Predicated region
    $region10: #{tpu_custom_call.1} parent=1 // pred_check
      _
    $region11: #{tpu_custom_call.1} parent=1 // pred_check_branch
      %20 = sbr.rel (0) target = $region13
    $region12: #{tpu_custom_call.1} parent=1 // pred_region
      _
    $region13: #{tpu_custom_call.1} parent=1 // pred_fallthru
      _
    // Predicated region
    $region14: #{tpu_custom_call.1} parent=1 // pred_check
      _
    $region15: #{tpu_custom_call.1} parent=1 // pred_check_branch
      %22 = sbr.rel (0) target = $region17
    $region16: #{tpu_custom_call.1} parent=1 // pred_region
      _
    $region17: #{tpu_custom_call.1} parent=1 // pred_fallthru
      _
    // Predicated region
    $region18: #{tpu_custom_call.1} parent=1 // pred_check
      _
    $region19: #{tpu_custom_call.1} parent=1 // pred_check_branch
      %24 = sbr.rel (0) target = $region21
    $region20: #{tpu_custom_call.1} parent=1 // pred_region
      _
    $region21: #{tpu_custom_call.1} parent=1 // pred_fallthru
      _
    // Predicated region
    $region22: #{tpu_custom_call.1} parent=1 // pred_check
      _
    $region23: #{tpu_custom_call.1} parent=1 // pred_check_branch
      %26 = sbr.rel (0) target = $region25
    $region24: #{tpu_custom_call.1} parent=1 // pred_region
      _
    $region25: #{tpu_custom_call.1} parent=1 // pred_fallthru
      _
    // Predicated region
    $region26: #{tpu_custom_call.1} parent=1 // pred_check
      _
    $region27: #{tpu_custom_call.1} parent=1 // pred_check_branch
      %28 = sbr.rel (0) target = $region29
    $region28: #{tpu_custom_call.1} parent=1 // pred_region
      _
    $region29: #{tpu_custom_call.1} parent=1 // pred_fallthru
      _
    // Predicated region
    $region30: #{tpu_custom_call.1} parent=1 // pred_check
      _
    $region31: #{tpu_custom_call.1} parent=1 // pred_check_branch
      %30 = sbr.rel (0) target = $region33
    $region32: #{tpu_custom_call.1} parent=1 // pred_region
      _
    $region33: #{tpu_custom_call.1} parent=1 // pred_fallthru
      _
    // Predicated region
    $region34: #{tpu_custom_call.1} parent=1 // pred_check
      _
    $region35: #{tpu_custom_call.1} parent=1 // pred_check_branch
      %32 = sbr.rel (0) target = $region37
    $region36: #{tpu_custom_call.1} parent=1 // pred_region
      _
    $region37: #{tpu_custom_call.1} parent=1 // pred_fallthru
      _
    %v33 = vld [vmem:[%s0] sm:$0xff]
    %v34 = vld [vmem:[%s0 + $0x8] sm:$0xff]
    %v35 = vld [vmem:[%s0 + $0x10] sm:$0xff]
    %v36 = vld [vmem:[%s0 + $0x18] sm:$0xff]
    %v37 = vld [vmem:[%s0 + $0x20] sm:$0xff]
    %v38 = vld [vmem:[%s0 + $0x28] sm:$0xff]
    %v39 = vld [vmem:[%s0 + $0x30] sm:$0xff]
    %v40 = vld [vmem:[%s0 + $0x38] sm:$0xff]
    %v41 = vlaneseq
    %v42 = vand.u32 %v41, 127
    %vm43 = vcmp.lt.s32.totalorder %v42, 16
    %v44 = vsel %vm43, 1, 0
    %v45 = vcvt.s32.f32 %v44
    %v46 = vld [vmem:[%s1] sm:$0xff]
    %v47 = vld [vmem:[%s1 + $0x8] sm:$0xff]
    %v48 = vld [vmem:[%s1 + $0x10] sm:$0xff]
    %v49 = vld [vmem:[%s1 + $0x18] sm:$0xff]
    %vm50 = vcmask 261120
    %v52 = vsel %vm50, %v46, 0
    %v55 = vsel %vm50, %v47, 0
    %v58 = vsel %vm50, %v48, 0
    %v61 = vsel %vm50, %v49, 0
    %63 = vmatprep.subr.mxu0 0.0
    %64 = vmatpush1.msra.mxu0 0.0
    %65 = vmatprep.subr.mxu0 0.0
    %66 = vmatpush1.msra.mxu0 0.0
    %67 = vmatprep.subr.mxu0 0.0
    %68 = vmatpush1.msra.mxu0 0.0
    %69 = vmatprep.subr.mxu0 0.0
    %70 = vmatpush1.msra.mxu0 0.0
    %71 = vmatprep.subr.mxu0 0.0
    %72 = vmatpush1.msra.mxu0 0.0
    %73 = vmatprep.subr.mxu0 0.0
    %74 = vmatpush1.msra.mxu0 0.0
    %75 = vmatprep.subr.mxu0 0.0
    %76 = vmatpush1.msra.mxu0 0.0
    %77 = vmatprep.subr.mxu0 0.0
    %78 = vmatpush1.msra.mxu0 0.0
    %79 = vmatprep.subr.mxu0 0.0
    %80 = vmatpush1.msra.mxu0 0.0
    %81 = vmatprep.subr.mxu0 0.0
    %82 = vmatpush1.msra.mxu0 0.0
    %83 = vmatprep.subr.mxu0 0.0
    %84 = vmatpush1.msra.mxu0 0.0
    %85 = vmatprep.subr.mxu0 0.0
    %86 = vmatpush1.msra.mxu0 0.0
    %87 = vmatprep.subr.mxu0 0.0
    %88 = vmatpush1.msra.mxu0 %v36
    %89 = vmatprep.subr.mxu0 0.0
    %90 = vmatpush1.msra.mxu0 %v35
    %91 = vmatprep.subr.mxu0 0.0
    %92 = vmatpush1.msra.mxu0 %v34
    %93 = vmatprep.subr.mxu0 0.0
    %94 = vmatpush1.msra.mxu0 %v33
    %95 = vmatprep.subr.mxu0 0.0
    %96 = vmatpush2.msra.mxu0 0.0
    %97 = vmatprep.subr.mxu0 0.0
    %98 = vmatpush2.msra.mxu0 0.0
    %99 = vmatprep.subr.mxu0 0.0
    %100 = vmatpush2.msra.mxu0 0.0
    %101 = vmatprep.subr.mxu0 0.0
    %102 = vmatpush2.msra.mxu0 0.0
    %103 = vmatprep.subr.mxu0 0.0
    %104 = vmatpush2.msra.mxu0 0.0
    %105 = vmatprep.subr.mxu0 0.0
    %106 = vmatpush2.msra.mxu0 0.0
    %107 = vmatprep.subr.mxu0 0.0
    %108 = vmatpush2.msra.mxu0 0.0
    %109 = vmatprep.subr.mxu0 0.0
    %110 = vmatpush2.msra.mxu0 0.0
    %111 = vmatprep.subr.mxu0 0.0
    %112 = vmatpush2.msra.mxu0 0.0
    %113 = vmatprep.subr.mxu0 0.0
    %114 = vmatpush2.msra.mxu0 0.0
    %115 = vmatprep.subr.mxu0 0.0
    %116 = vmatpush2.msra.mxu0 0.0
    %117 = vmatprep.subr.mxu0 0.0
    %118 = vmatpush2.msra.mxu0 0.0
    %119 = vmatprep.subr.mxu0 0.0
    %120 = vmatpush2.msra.mxu0 0.0
    %121 = vmatprep.subr.mxu0 0.0
    %122 = vmatpush2.msra.mxu0 0.0
    %123 = vmatprep.subr.mxu0 0.0
    %124 = vmatpush2.msra.mxu0 0.0
    %125 = vmatprep.subr.mxu0 0.0
    %126 = vmatpush2.msra.mxu0 0.0
    %127 = vmatprep.mubr.f32.mxu0 0.0
    %128 = vmatmul.mubr.f32.gmra.mxu0 %v52
    %v129 = vpop.f32.mrf.mxu0
    %v130 = vadd.f32 0.0, %v129
    %v131 = vpop.f32.mrf.mxu0
    %132 = vmatprep.mubr.f32.mxu0 0.0
    %133 = vmatmul.mubr.f32.gmra.mxu0 %v55
    %v134 = vpop.f32.mrf.mxu0
    %v135 = vadd.f32 0.0, %v134
    %v136 = vpop.f32.mrf.mxu0
    %137 = vmatprep.mubr.f32.mxu0 0.0
    %138 = vmatmul.mubr.f32.gmra.mxu0 %v58
    %v139 = vpop.f32.mrf.mxu0
    %v140 = vadd.f32 0.0, %v139
    %v141 = vpop.f32.mrf.mxu0
    %142 = vmatprep.mubr.f32.mxu0 0.0
    %143 = vmatmul.mubr.f32.gmra.mxu0 %v61
    %v144 = vpop.f32.mrf.mxu0
    %v145 = vadd.f32 0.0, %v144
    %v146 = vpop.f32.mrf.mxu0
    %147 = vdwg.mxu0
    %148 = vmatprep.subr.mxu0 0.0
    %149 = vmatpush1.msra.mxu0 0.0
    %150 = vmatprep.subr.mxu0 0.0
    %151 = vmatpush1.msra.mxu0 0.0
    %152 = vmatprep.subr.mxu0 0.0
    %153 = vmatpush1.msra.mxu0 0.0
    %154 = vmatprep.subr.mxu0 0.0
    %155 = vmatpush1.msra.mxu0 0.0
    %156 = vmatprep.subr.mxu0 0.0
    %157 = vmatpush1.msra.mxu0 0.0
    %158 = vmatprep.subr.mxu0 0.0
    %159 = vmatpush1.msra.mxu0 0.0
    %160 = vmatprep.subr.mxu0 0.0
    %161 = vmatpush1.msra.mxu0 0.0
    %162 = vmatprep.subr.mxu0 0.0
    %163 = vmatpush1.msra.mxu0 0.0
    %164 = vmatprep.subr.mxu0 0.0
    %165 = vmatpush1.msra.mxu0 0.0
    %166 = vmatprep.subr.mxu0 0.0
    %167 = vmatpush1.msra.mxu0 0.0
    %168 = vmatprep.subr.mxu0 0.0
    %169 = vmatpush1.msra.mxu0 0.0
    %170 = vmatprep.subr.mxu0 0.0
    %171 = vmatpush1.msra.mxu0 0.0
    %172 = vmatprep.subr.mxu0 0.0
    %173 = vmatpush1.msra.mxu0 %v40
    %174 = vmatprep.subr.mxu0 0.0
    %175 = vmatpush1.msra.mxu0 %v39
    %176 = vmatprep.subr.mxu0 0.0
    %177 = vmatpush1.msra.mxu0 %v38
    %178 = vmatprep.subr.mxu0 0.0
    %179 = vmatpush1.msra.mxu0 %v37
    %180 = vmatprep.subr.mxu0 0.0
    %181 = vmatpush2.msra.mxu0 0.0
    %182 = vmatprep.subr.mxu0 0.0
    %183 = vmatpush2.msra.mxu0 0.0
    %184 = vmatprep.subr.mxu0 0.0
    %185 = vmatpush2.msra.mxu0 0.0
    %186 = vmatprep.subr.mxu0 0.0
    %187 = vmatpush2.msra.mxu0 0.0
    %188 = vmatprep.subr.mxu0 0.0
    %189 = vmatpush2.msra.mxu0 0.0
    %190 = vmatprep.subr.mxu0 0.0
    %191 = vmatpush2.msra.mxu0 0.0
    %192 = vmatprep.subr.mxu0 0.0
    %193 = vmatpush2.msra.mxu0 0.0
    %194 = vmatprep.subr.mxu0 0.0
    %195 = vmatpush2.msra.mxu0 0.0
    %196 = vmatprep.subr.mxu0 0.0
    %197 = vmatpush2.msra.mxu0 0.0
    %198 = vmatprep.subr.mxu0 0.0
    %199 = vmatpush2.msra.mxu0 0.0
    %200 = vmatprep.subr.mxu0 0.0
    %201 = vmatpush2.msra.mxu0 0.0
    %202 = vmatprep.subr.mxu0 0.0
    %203 = vmatpush2.msra.mxu0 0.0
    %204 = vmatprep.subr.mxu0 0.0
    %205 = vmatpush2.msra.mxu0 0.0
    %206 = vmatprep.subr.mxu0 0.0
    %207 = vmatpush2.msra.mxu0 0.0
    %208 = vmatprep.subr.mxu0 0.0
    %209 = vmatpush2.msra.mxu0 0.0
    %210 = vmatprep.subr.mxu0 0.0
    %211 = vmatpush2.msra.mxu0 0.0
    %212 = vmatprep.mubr.f32.mxu0 0.0
    %213 = vmatmul.mubr.f32.gmra.mxu0 %v52
    %v214 = vpop.f32.mrf.mxu0
    %v215 = vadd.f32 0.0, %v214
    %v216 = vpop.f32.mrf.mxu0
    %217 = vmatprep.mubr.f32.mxu0 0.0
    %218 = vmatmul.mubr.f32.gmra.mxu0 %v55
    %v219 = vpop.f32.mrf.mxu0
    %v220 = vadd.f32 0.0, %v219
    %v221 = vpop.f32.mrf.mxu0
    %222 = vmatprep.mubr.f32.mxu0 0.0
    %223 = vmatmul.mubr.f32.gmra.mxu0 %v58
    %v224 = vpop.f32.mrf.mxu0
    %v225 = vadd.f32 0.0, %v224
    %v226 = vpop.f32.mrf.mxu0
    %227 = vmatprep.mubr.f32.mxu0 0.0
    %228 = vmatmul.mubr.f32.gmra.mxu0 %v61
    %v229 = vpop.f32.mrf.mxu0
    %v230 = vadd.f32 0.0, %v229
    %v231 = vpop.f32.mrf.mxu0
    %232 = vdwg.mxu0
    %233 = vadd.xlane.f32.xlu0 %v130
    %v234 = vpop.xlane.xlu0 %233
    %235 = vadd.xlane.f32.xlu0 %v135
    %v236 = vpop.xlane.xlu0 %235
    %237 = vadd.xlane.f32.xlu0 %v140
    %v238 = vpop.xlane.xlu0 %237
    %239 = vadd.xlane.f32.xlu0 %v145
    %v240 = vpop.xlane.xlu0 %239
    %241 = vadd.xlane.f32.xlu0 %v215
    %v242 = vpop.xlane.xlu0 %241
    %243 = vadd.xlane.f32.xlu0 %v220
    %v244 = vpop.xlane.xlu0 %243
    %245 = vadd.xlane.f32.xlu0 %v225
    %v246 = vpop.xlane.xlu0 %245
    %247 = vadd.xlane.f32.xlu0 %v230
    %v248 = vpop.xlane.xlu0 %247
    %v249 = vmul.f32 %v130, %v130
    %v250 = vmul.f32 %v135, %v135
    %v251 = vmul.f32 %v140, %v140
    %v252 = vmul.f32 %v145, %v145
    %v253 = vmul.f32 %v215, %v215
    %v254 = vmul.f32 %v220, %v220
    %v255 = vmul.f32 %v225, %v225
    %v256 = vmul.f32 %v230, %v230
    %257 = vadd.xlane.f32.xlu0 %v249
    %v258 = vpop.xlane.xlu0 %257
    %259 = vadd.xlane.f32.xlu0 %v250
    %v260 = vpop.xlane.xlu0 %259
    %261 = vadd.xlane.f32.xlu0 %v251
    %v262 = vpop.xlane.xlu0 %261
    %263 = vadd.xlane.f32.xlu0 %v252
    %v264 = vpop.xlane.xlu0 %263
    %265 = vadd.xlane.f32.xlu0 %v253
    %v266 = vpop.xlane.xlu0 %265
    %267 = vadd.xlane.f32.xlu0 %v254
    %v268 = vpop.xlane.xlu0 %267
    %269 = vadd.xlane.f32.xlu0 %v255
    %v270 = vpop.xlane.xlu0 %269
    %271 = vadd.xlane.f32.xlu0 %v256
    %v272 = vpop.xlane.xlu0 %271
    %v273 = vadd.f32 %v234, %v242
    %v274 = vadd.f32 %v236, %v244
    %v275 = vadd.f32 %v238, %v246
    %v276 = vadd.f32 %v240, %v248
    %v277 = vadd.f32 %v258, %v266
    %v278 = vadd.f32 %v260, %v268
    %v279 = vadd.f32 %v262, %v270
    %v280 = vadd.f32 %v264, %v272
    %v281 = vmul.f32 %v273, 0.03125
    %v282 = vmul.f32 %v274, 0.03125
    %v283 = vmul.f32 %v275, 0.03125
    %v284 = vmul.f32 %v276, 0.03125
    %v285 = vmul.f32 %v277, 0.03125
    %v286 = vmul.f32 %v278, 0.03125
    %v287 = vmul.f32 %v279, 0.03125
    %v288 = vmul.f32 %v280, 0.03125
    %v289 = vmul.f32 %v281, %v281
    %v290 = vmul.f32 %v282, %v282
    %v291 = vmul.f32 %v283, %v283
    %v292 = vmul.f32 %v284, %v284
    %v293 = vsub.f32 %v285, %v289
    %v294 = vsub.f32 %v286, %v290
    %v295 = vsub.f32 %v287, %v291
    %v296 = vsub.f32 %v288, %v292
    %v297 = vld [vmem:[%s2] sm:$0xff]
    %v298 = vld [vmem:[%s2 + $0x8] sm:$0xff]
    %v299 = vld [vmem:[%s2 + $0x10] sm:$0xff]
    %v300 = vld [vmem:[%s2 + $0x18] sm:$0xff]
    %v301 = vadd.f32 %v293, 1e-05
    %v302 = vadd.f32 %v294, 1e-05
    %v303 = vadd.f32 %v295, 1e-05
    %v304 = vadd.f32 %v296, 1e-05
    %v305 = vrsqrt.pop %v301
    %v306 = vrsqrt.pop %v302
    %v307 = vrsqrt.pop %v303
    %v308 = vrsqrt.pop %v304
    %v309 = vmul.f32 %v297, %v305
    %v310 = vmul.f32 %v298, %v306
    %v311 = vmul.f32 %v299, %v307
    %v312 = vmul.f32 %v300, %v308
    %v313 = vld [vmem:[%s3] sm:$0xff]
    %v314 = vld [vmem:[%s3 + $0x8] sm:$0xff]
    %v315 = vld [vmem:[%s3 + $0x10] sm:$0xff]
    %v316 = vld [vmem:[%s3 + $0x18] sm:$0xff]
    %v317 = vmul.f32 %v281, %v309
    %v318 = vmul.f32 %v282, %v310
    %v319 = vmul.f32 %v283, %v311
    %v320 = vmul.f32 %v284, %v312
    %v321 = vsub.f32 %v313, %v317
    %v322 = vsub.f32 %v314, %v318
    %v323 = vsub.f32 %v315, %v319
    %v324 = vsub.f32 %v316, %v320
    %326 = vset.pattern.permute.xlu0 0
    %327 = vperm.xlu0 %326, %v309
    %v328 = vpop.permute.xlu0 %327
    %331 = vset.pattern.permute.xlu0 0
    %332 = vperm.xlu0 %331, %v310
    %v333 = vpop.permute.xlu0 %332
    %336 = vset.pattern.permute.xlu0 0
    %337 = vperm.xlu0 %336, %v311
    %v338 = vpop.permute.xlu0 %337
    %341 = vset.pattern.permute.xlu0 0
    %342 = vperm.xlu0 %341, %v312
    %v343 = vpop.permute.xlu0 %342
    %v345 = vmul.f32 %v130, %v328
    %v346 = vmul.f32 %v135, %v333
    %v347 = vmul.f32 %v140, %v338
    %v348 = vmul.f32 %v145, %v343
    %v349 = vmul.f32 %v215, %v328
    %v350 = vmul.f32 %v220, %v333
    %v351 = vmul.f32 %v225, %v338
    %v352 = vmul.f32 %v230, %v343
    %354 = vset.pattern.permute.xlu0 0
    %355 = vperm.xlu0 %354, %v321
    %v356 = vpop.permute.xlu0 %355
    %359 = vset.pattern.permute.xlu0 0
    %360 = vperm.xlu0 %359, %v322
    %v361 = vpop.permute.xlu0 %360
    %364 = vset.pattern.permute.xlu0 0
    %365 = vperm.xlu0 %364, %v323
    %v366 = vpop.permute.xlu0 %365
    %369 = vset.pattern.permute.xlu0 0
    %370 = vperm.xlu0 %369, %v324
    %v371 = vpop.permute.xlu0 %370
    %v373 = vadd.f32 %v345, %v356
    %v374 = vadd.f32 %v346, %v361
    %v375 = vadd.f32 %v347, %v366
    %v376 = vadd.f32 %v348, %v371
    %v377 = vadd.f32 %v349, %v356
    %v378 = vadd.f32 %v350, %v361
    %v379 = vadd.f32 %v351, %v366
    %v380 = vadd.f32 %v352, %v371
    %v381 = vmax.f32 %v373, 0.0
    %v382 = vmax.f32 %v374, 0.0
    %v383 = vmax.f32 %v375, 0.0
    %v384 = vmax.f32 %v376, 0.0
    %v385 = vmax.f32 %v377, 0.0
    %v386 = vmax.f32 %v378, 0.0
    %v387 = vmax.f32 %v379, 0.0
    %v388 = vmax.f32 %v380, 0.0
    %v389 = vmul.f32 %v381, %v45
    %v390 = vmul.f32 %v382, %v45
    %v391 = vmul.f32 %v383, %v45
    %v392 = vmul.f32 %v384, %v45
    %v393 = vmul.f32 %v385, %v45
    %v394 = vmul.f32 %v386, %v45
    %v395 = vmul.f32 %v387, %v45
    %v396 = vmul.f32 %v388, %v45
    %v397 = vld [vmem:[%s4] sm:$0xff]
    %v398 = vld [vmem:[%s4 + $0x8] sm:$0xff]
    %v399 = vld [vmem:[%s4 + $0x10] sm:$0xff]
    %v400 = vld [vmem:[%s4 + $0x18] sm:$0xff]
    %v402 = vsel %vm50, %v397, 0
    %v405 = vsel %vm50, %v398, 0
    %v408 = vsel %vm50, %v399, 0
    %v411 = vsel %vm50, %v400, 0
    %413 = vmatprep.subr.mxu0 0.0
    %414 = vmatpush1.msra.mxu0 0.0
    %415 = vmatprep.subr.mxu0 0.0
    %416 = vmatpush1.msra.mxu0 0.0
    %417 = vmatprep.subr.mxu0 0.0
    %418 = vmatpush1.msra.mxu0 0.0
    %419 = vmatprep.subr.mxu0 0.0
    %420 = vmatpush1.msra.mxu0 0.0
    %421 = vmatprep.subr.mxu0 0.0
    %422 = vmatpush1.msra.mxu0 0.0
    %423 = vmatprep.subr.mxu0 0.0
    %424 = vmatpush1.msra.mxu0 0.0
    %425 = vmatprep.subr.mxu0 0.0
    %426 = vmatpush1.msra.mxu0 0.0
    %427 = vmatprep.subr.mxu0 0.0
    %428 = vmatpush1.msra.mxu0 0.0
    %429 = vmatprep.subr.mxu0 0.0
    %430 = vmatpush1.msra.mxu0 0.0
    %431 = vmatprep.subr.mxu0 0.0
    %432 = vmatpush1.msra.mxu0 0.0
    %433 = vmatprep.subr.mxu0 0.0
    %434 = vmatpush1.msra.mxu0 0.0
    %435 = vmatprep.subr.mxu0 0.0
    %436 = vmatpush1.msra.mxu0 0.0
    %437 = vmatprep.subr.mxu0 0.0
    %438 = vmatpush1.msra.mxu0 %v392
    %439 = vmatprep.subr.mxu0 0.0
    %440 = vmatpush1.msra.mxu0 %v391
    %441 = vmatprep.subr.mxu0 0.0
    %442 = vmatpush1.msra.mxu0 %v390
    %443 = vmatprep.subr.mxu0 0.0
    %444 = vmatpush1.msra.mxu0 %v389
    %445 = vmatprep.subr.mxu0 0.0
    %446 = vmatpush2.msra.mxu0 0.0
    %447 = vmatprep.subr.mxu0 0.0
    %448 = vmatpush2.msra.mxu0 0.0
    %449 = vmatprep.subr.mxu0 0.0
    %450 = vmatpush2.msra.mxu0 0.0
    %451 = vmatprep.subr.mxu0 0.0
    %452 = vmatpush2.msra.mxu0 0.0
    %453 = vmatprep.subr.mxu0 0.0
    %454 = vmatpush2.msra.mxu0 0.0
    %455 = vmatprep.subr.mxu0 0.0
    %456 = vmatpush2.msra.mxu0 0.0
    %457 = vmatprep.subr.mxu0 0.0
    %458 = vmatpush2.msra.mxu0 0.0
    %459 = vmatprep.subr.mxu0 0.0
    %460 = vmatpush2.msra.mxu0 0.0
    %461 = vmatprep.subr.mxu0 0.0
    %462 = vmatpush2.msra.mxu0 0.0
    %463 = vmatprep.subr.mxu0 0.0
    %464 = vmatpush2.msra.mxu0 0.0
    %465 = vmatprep.subr.mxu0 0.0
    %466 = vmatpush2.msra.mxu0 0.0
    %467 = vmatprep.subr.mxu0 0.0
    %468 = vmatpush2.msra.mxu0 0.0
    %469 = vmatprep.subr.mxu0 0.0
    %470 = vmatpush2.msra.mxu0 0.0
    %471 = vmatprep.subr.mxu0 0.0
    %472 = vmatpush2.msra.mxu0 0.0
    %473 = vmatprep.subr.mxu0 0.0
    %474 = vmatpush2.msra.mxu0 0.0
    %475 = vmatprep.subr.mxu0 0.0
    %476 = vmatpush2.msra.mxu0 0.0
    %477 = vmatprep.mubr.f32.mxu0 0.0
    %478 = vmatmul.mubr.f32.gmra.mxu0 %v402
    %v479 = vpop.f32.mrf.mxu0
    %v480 = vadd.f32 0.0, %v479
    %v481 = vpop.f32.mrf.mxu0
    %482 = vmatprep.mubr.f32.mxu0 0.0
    %483 = vmatmul.mubr.f32.gmra.mxu0 %v405
    %v484 = vpop.f32.mrf.mxu0
    %v485 = vadd.f32 0.0, %v484
    %v486 = vpop.f32.mrf.mxu0
    %487 = vmatprep.mubr.f32.mxu0 0.0
    %488 = vmatmul.mubr.f32.gmra.mxu0 %v408
    %v489 = vpop.f32.mrf.mxu0
    %v490 = vadd.f32 0.0, %v489
    %v491 = vpop.f32.mrf.mxu0
    %492 = vmatprep.mubr.f32.mxu0 0.0
    %493 = vmatmul.mubr.f32.gmra.mxu0 %v411
    %v494 = vpop.f32.mrf.mxu0
    %v495 = vadd.f32 0.0, %v494
    %v496 = vpop.f32.mrf.mxu0
    %497 = vdwg.mxu0
    %498 = vmatprep.subr.mxu0 0.0
    %499 = vmatpush1.msra.mxu0 0.0
    %500 = vmatprep.subr.mxu0 0.0
    %501 = vmatpush1.msra.mxu0 0.0
    %502 = vmatprep.subr.mxu0 0.0
    %503 = vmatpush1.msra.mxu0 0.0
    %504 = vmatprep.subr.mxu0 0.0
    %505 = vmatpush1.msra.mxu0 0.0
    %506 = vmatprep.subr.mxu0 0.0
    %507 = vmatpush1.msra.mxu0 0.0
    %508 = vmatprep.subr.mxu0 0.0
    %509 = vmatpush1.msra.mxu0 0.0
    %510 = vmatprep.subr.mxu0 0.0
    %511 = vmatpush1.msra.mxu0 0.0
    %512 = vmatprep.subr.mxu0 0.0
    %513 = vmatpush1.msra.mxu0 0.0
    %514 = vmatprep.subr.mxu0 0.0
    %515 = vmatpush1.msra.mxu0 0.0
    %516 = vmatprep.subr.mxu0 0.0
    %517 = vmatpush1.msra.mxu0 0.0
    %518 = vmatprep.subr.mxu0 0.0
    %519 = vmatpush1.msra.mxu0 0.0
    %520 = vmatprep.subr.mxu0 0.0
    %521 = vmatpush1.msra.mxu0 0.0
    %522 = vmatprep.subr.mxu0 0.0
    %523 = vmatpush1.msra.mxu0 %v396
    %524 = vmatprep.subr.mxu0 0.0
    %525 = vmatpush1.msra.mxu0 %v395
    %526 = vmatprep.subr.mxu0 0.0
    %527 = vmatpush1.msra.mxu0 %v394
    %528 = vmatprep.subr.mxu0 0.0
    %529 = vmatpush1.msra.mxu0 %v393
    %530 = vmatprep.subr.mxu0 0.0
    %531 = vmatpush2.msra.mxu0 0.0
    %532 = vmatprep.subr.mxu0 0.0
    %533 = vmatpush2.msra.mxu0 0.0
    %534 = vmatprep.subr.mxu0 0.0
    %535 = vmatpush2.msra.mxu0 0.0
    %536 = vmatprep.subr.mxu0 0.0
    %537 = vmatpush2.msra.mxu0 0.0
    %538 = vmatprep.subr.mxu0 0.0
    %539 = vmatpush2.msra.mxu0 0.0
    %540 = vmatprep.subr.mxu0 0.0
    %541 = vmatpush2.msra.mxu0 0.0
    %542 = vmatprep.subr.mxu0 0.0
    %543 = vmatpush2.msra.mxu0 0.0
    %544 = vmatprep.subr.mxu0 0.0
    %545 = vmatpush2.msra.mxu0 0.0
    %546 = vmatprep.subr.mxu0 0.0
    %547 = vmatpush2.msra.mxu0 0.0
    %548 = vmatprep.subr.mxu0 0.0
    %549 = vmatpush2.msra.mxu0 0.0
    %550 = vmatprep.subr.mxu0 0.0
    %551 = vmatpush2.msra.mxu0 0.0
    %552 = vmatprep.subr.mxu0 0.0
    %553 = vmatpush2.msra.mxu0 0.0
    %554 = vmatprep.subr.mxu0 0.0
    %555 = vmatpush2.msra.mxu0 0.0
    %556 = vmatprep.subr.mxu0 0.0
    %557 = vmatpush2.msra.mxu0 0.0
    %558 = vmatprep.subr.mxu0 0.0
    %559 = vmatpush2.msra.mxu0 0.0
    %560 = vmatprep.subr.mxu0 0.0
    %561 = vmatpush2.msra.mxu0 0.0
    %562 = vmatprep.mubr.f32.mxu0 0.0
    %563 = vmatmul.mubr.f32.gmra.mxu0 %v402
    %v564 = vpop.f32.mrf.mxu0
    %v565 = vadd.f32 0.0, %v564
    %v566 = vpop.f32.mrf.mxu0
    %567 = vmatprep.mubr.f32.mxu0 0.0
    %568 = vmatmul.mubr.f32.gmra.mxu0 %v405
    %v569 = vpop.f32.mrf.mxu0
    %v570 = vadd.f32 0.0, %v569
    %v571 = vpop.f32.mrf.mxu0
    %572 = vmatprep.mubr.f32.mxu0 0.0
    %573 = vmatmul.mubr.f32.gmra.mxu0 %v408
    %v574 = vpop.f32.mrf.mxu0
    %v575 = vadd.f32 0.0, %v574
    %v576 = vpop.f32.mrf.mxu0
    %577 = vmatprep.mubr.f32.mxu0 0.0
    %578 = vmatmul.mubr.f32.gmra.mxu0 %v411
    %v579 = vpop.f32.mrf.mxu0
    %v580 = vadd.f32 0.0, %v579
    %v581 = vpop.f32.mrf.mxu0
    %582 = vdwg.mxu0
    %583 = vadd.xlane.f32.xlu0 %v480
    %v584 = vpop.xlane.xlu0 %583
    %585 = vadd.xlane.f32.xlu0 %v485
    %v586 = vpop.xlane.xlu0 %585
    %587 = vadd.xlane.f32.xlu0 %v490
    %v588 = vpop.xlane.xlu0 %587
    %589 = vadd.xlane.f32.xlu0 %v495
    %v590 = vpop.xlane.xlu0 %589
    %591 = vadd.xlane.f32.xlu0 %v565
    %v592 = vpop.xlane.xlu0 %591
    %593 = vadd.xlane.f32.xlu0 %v570
    %v594 = vpop.xlane.xlu0 %593
    %595 = vadd.xlane.f32.xlu0 %v575
    %v596 = vpop.xlane.xlu0 %595
    %597 = vadd.xlane.f32.xlu0 %v580
    %v598 = vpop.xlane.xlu0 %597
    %v599 = vmul.f32 %v480, %v480
    %v600 = vmul.f32 %v485, %v485
    %v601 = vmul.f32 %v490, %v490
    %v602 = vmul.f32 %v495, %v495
    %v603 = vmul.f32 %v565, %v565
    %v604 = vmul.f32 %v570, %v570
    %v605 = vmul.f32 %v575, %v575
    %v606 = vmul.f32 %v580, %v580
    %607 = vadd.xlane.f32.xlu0 %v599
    %v608 = vpop.xlane.xlu0 %607
    %609 = vadd.xlane.f32.xlu0 %v600
    %v610 = vpop.xlane.xlu0 %609
    %611 = vadd.xlane.f32.xlu0 %v601
    %v612 = vpop.xlane.xlu0 %611
    %613 = vadd.xlane.f32.xlu0 %v602
    %v614 = vpop.xlane.xlu0 %613
    %615 = vadd.xlane.f32.xlu0 %v603
    %v616 = vpop.xlane.xlu0 %615
    %617 = vadd.xlane.f32.xlu0 %v604
    %v618 = vpop.xlane.xlu0 %617
    %619 = vadd.xlane.f32.xlu0 %v605
    %v620 = vpop.xlane.xlu0 %619
    %621 = vadd.xlane.f32.xlu0 %v606
    %v622 = vpop.xlane.xlu0 %621
    %v623 = vadd.f32 %v584, %v592
    %v624 = vadd.f32 %v586, %v594
    %v625 = vadd.f32 %v588, %v596
    %v626 = vadd.f32 %v590, %v598
    %v627 = vadd.f32 %v608, %v616
    %v628 = vadd.f32 %v610, %v618
    %v629 = vadd.f32 %v612, %v620
    %v630 = vadd.f32 %v614, %v622
    %v631 = vmul.f32 %v623, 0.03125
    %v632 = vmul.f32 %v624, 0.03125
    %v633 = vmul.f32 %v625, 0.03125
    %v634 = vmul.f32 %v626, 0.03125
    %v635 = vmul.f32 %v627, 0.03125
    %v636 = vmul.f32 %v628, 0.03125
    %v637 = vmul.f32 %v629, 0.03125
    %v638 = vmul.f32 %v630, 0.03125
    %v639 = vmul.f32 %v631, %v631
    %v640 = vmul.f32 %v632, %v632
    %v641 = vmul.f32 %v633, %v633
    %v642 = vmul.f32 %v634, %v634
    %v643 = vsub.f32 %v635, %v639
    %v644 = vsub.f32 %v636, %v640
    %v645 = vsub.f32 %v637, %v641
    %v646 = vsub.f32 %v638, %v642
    %v647 = vld [vmem:[%s5] sm:$0xff]
    %v648 = vld [vmem:[%s5 + $0x8] sm:$0xff]
    %v649 = vld [vmem:[%s5 + $0x10] sm:$0xff]
    %v650 = vld [vmem:[%s5 + $0x18] sm:$0xff]
    %v651 = vadd.f32 %v643, 1e-05
    %v652 = vadd.f32 %v644, 1e-05
    %v653 = vadd.f32 %v645, 1e-05
    %v654 = vadd.f32 %v646, 1e-05
    %v655 = vrsqrt.pop %v651
    %v656 = vrsqrt.pop %v652
    %v657 = vrsqrt.pop %v653
    %v658 = vrsqrt.pop %v654
    %v659 = vmul.f32 %v647, %v655
    %v660 = vmul.f32 %v648, %v656
    %v661 = vmul.f32 %v649, %v657
    %v662 = vmul.f32 %v650, %v658
    %v663 = vld [vmem:[%s6] sm:$0xff]
    %v664 = vld [vmem:[%s6 + $0x8] sm:$0xff]
    %v665 = vld [vmem:[%s6 + $0x10] sm:$0xff]
    %v666 = vld [vmem:[%s6 + $0x18] sm:$0xff]
    %v667 = vmul.f32 %v631, %v659
    %v668 = vmul.f32 %v632, %v660
    %v669 = vmul.f32 %v633, %v661
    %v670 = vmul.f32 %v634, %v662
    %v671 = vsub.f32 %v663, %v667
    %v672 = vsub.f32 %v664, %v668
    %v673 = vsub.f32 %v665, %v669
    %v674 = vsub.f32 %v666, %v670
    %v675 = vmul.f32 %v659, 0.0625
    %v676 = vmul.f32 %v660, 0.0625
    %v677 = vmul.f32 %v661, 0.0625
    %v678 = vmul.f32 %v662, 0.0625
    %v679 = vmul.f32 %v584, %v675
    %v680 = vmul.f32 %v586, %v676
    %v681 = vmul.f32 %v588, %v677
    %v682 = vmul.f32 %v590, %v678
    %v683 = vmul.f32 %v592, %v675
    %v684 = vmul.f32 %v594, %v676
    %v685 = vmul.f32 %v596, %v677
    %v686 = vmul.f32 %v598, %v678
    %v687 = vadd.f32 %v679, %v671
    %v688 = vadd.f32 %v680, %v672
    %v689 = vadd.f32 %v681, %v673
    %v690 = vadd.f32 %v682, %v674
    %v691 = vadd.f32 %v683, %v671
    %v692 = vadd.f32 %v684, %v672
    %v693 = vadd.f32 %v685, %v673
    %v694 = vadd.f32 %v686, %v674
    %v695 = vld [vmem:[%s7] sm:$0x3]
    %v696 = vld [vmem:[%s8] sm:$0xff]
    %v697 = vld [vmem:[%s8 + $0x8] sm:$0xff]
    %v698 = vld [vmem:[%s8 + $0x10] sm:$0xff]
    %v699 = vld [vmem:[%s8 + $0x18] sm:$0xff]
    %v701 = vsel %vm50, %v695, 0
    %703 = vmatprep.subr.mxu0 0.0
    %704 = vmatpush1.msra.mxu0 0.0
    %705 = vmatprep.subr.mxu0 0.0
    %706 = vmatpush1.msra.mxu0 0.0
    %707 = vmatprep.subr.mxu0 0.0
    %708 = vmatpush1.msra.mxu0 0.0
    %709 = vmatprep.subr.mxu0 0.0
    %710 = vmatpush1.msra.mxu0 0.0
    %711 = vmatprep.subr.mxu0 0.0
    %712 = vmatpush1.msra.mxu0 0.0
    %713 = vmatprep.subr.mxu0 0.0
    %714 = vmatpush1.msra.mxu0 0.0
    %715 = vmatprep.subr.mxu0 0.0
    %716 = vmatpush1.msra.mxu0 0.0
    %717 = vmatprep.subr.mxu0 0.0
    %718 = vmatpush1.msra.mxu0 0.0
    %719 = vmatprep.subr.mxu0 0.0
    %720 = vmatpush1.msra.mxu0 0.0
    %721 = vmatprep.subr.mxu0 0.0
    %722 = vmatpush1.msra.mxu0 0.0
    %723 = vmatprep.subr.mxu0 0.0
    %724 = vmatpush1.msra.mxu0 0.0
    %725 = vmatprep.subr.mxu0 0.0
    %726 = vmatpush1.msra.mxu0 0.0
    %727 = vmatprep.subr.mxu0 0.0
    %728 = vmatpush1.msra.mxu0 %v690
    %729 = vmatprep.subr.mxu0 0.0
    %730 = vmatpush1.msra.mxu0 %v689
    %731 = vmatprep.subr.mxu0 0.0
    %732 = vmatpush1.msra.mxu0 %v688
    %733 = vmatprep.subr.mxu0 0.0
    %734 = vmatpush1.msra.mxu0 %v687
    %735 = vmatprep.subr.mxu0 0.0
    %736 = vmatpush2.msra.mxu0 0.0
    %737 = vmatprep.subr.mxu0 0.0
    %738 = vmatpush2.msra.mxu0 0.0
    %739 = vmatprep.subr.mxu0 0.0
    %740 = vmatpush2.msra.mxu0 0.0
    %741 = vmatprep.subr.mxu0 0.0
    %742 = vmatpush2.msra.mxu0 0.0
    %743 = vmatprep.subr.mxu0 0.0
    %744 = vmatpush2.msra.mxu0 0.0
    %745 = vmatprep.subr.mxu0 0.0
    %746 = vmatpush2.msra.mxu0 0.0
    %747 = vmatprep.subr.mxu0 0.0
    %748 = vmatpush2.msra.mxu0 0.0
    %749 = vmatprep.subr.mxu0 0.0
    %750 = vmatpush2.msra.mxu0 0.0
    %751 = vmatprep.subr.mxu0 0.0
    %752 = vmatpush2.msra.mxu0 0.0
    %753 = vmatprep.subr.mxu0 0.0
    %754 = vmatpush2.msra.mxu0 0.0
    %755 = vmatprep.subr.mxu0 0.0
    %756 = vmatpush2.msra.mxu0 0.0
    %757 = vmatprep.subr.mxu0 0.0
    %758 = vmatpush2.msra.mxu0 0.0
    %759 = vmatprep.subr.mxu0 0.0
    %760 = vmatpush2.msra.mxu0 0.0
    %761 = vmatprep.subr.mxu0 0.0
    %762 = vmatpush2.msra.mxu0 0.0
    %763 = vmatprep.subr.mxu0 0.0
    %764 = vmatpush2.msra.mxu0 0.0
    %765 = vmatprep.subr.mxu0 0.0
    %766 = vmatpush2.msra.mxu0 0.0
    %767 = vmatprep.mubr.f32.mxu0 0.0
    %768 = vmatmul.mubr.f32.gmra.mxu0 %v701
    %v769 = vpop.f32.mrf.mxu0
    %v770 = vadd.f32 0.0, %v769
    %v771 = vpop.f32.mrf.mxu0
    %772 = vdwg.mxu0
    %773 = vmatprep.subr.mxu0 0.0
    %774 = vmatpush1.msra.mxu0 0.0
    %775 = vmatprep.subr.mxu0 0.0
    %776 = vmatpush1.msra.mxu0 0.0
    %777 = vmatprep.subr.mxu0 0.0
    %778 = vmatpush1.msra.mxu0 0.0
    %779 = vmatprep.subr.mxu0 0.0
    %780 = vmatpush1.msra.mxu0 0.0
    %781 = vmatprep.subr.mxu0 0.0
    %782 = vmatpush1.msra.mxu0 0.0
    %783 = vmatprep.subr.mxu0 0.0
    %784 = vmatpush1.msra.mxu0 0.0
    %785 = vmatprep.subr.mxu0 0.0
    %786 = vmatpush1.msra.mxu0 0.0
    %787 = vmatprep.subr.mxu0 0.0
    %788 = vmatpush1.msra.mxu0 0.0
    %789 = vmatprep.subr.mxu0 0.0
    %790 = vmatpush1.msra.mxu0 0.0
    %791 = vmatprep.subr.mxu0 0.0
    %792 = vmatpush1.msra.mxu0 0.0
    %793 = vmatprep.subr.mxu0 0.0
    %794 = vmatpush1.msra.mxu0 0.0
    %795 = vmatprep.subr.mxu0 0.0
    %796 = vmatpush1.msra.mxu0 0.0
    %797 = vmatprep.subr.mxu0 0.0
    %798 = vmatpush1.msra.mxu0 %v694
    %799 = vmatprep.subr.mxu0 0.0
    %800 = vmatpush1.msra.mxu0 %v693
    %801 = vmatprep.subr.mxu0 0.0
    %802 = vmatpush1.msra.mxu0 %v692
    %803 = vmatprep.subr.mxu0 0.0
    %804 = vmatpush1.msra.mxu0 %v691
    %805 = vmatprep.subr.mxu0 0.0
    %806 = vmatpush2.msra.mxu0 0.0
    %807 = vmatprep.subr.mxu0 0.0
    %808 = vmatpush2.msra.mxu0 0.0
    %809 = vmatprep.subr.mxu0 0.0
    %810 = vmatpush2.msra.mxu0 0.0
    %811 = vmatprep.subr.mxu0 0.0
    %812 = vmatpush2.msra.mxu0 0.0
    %813 = vmatprep.subr.mxu0 0.0
    %814 = vmatpush2.msra.mxu0 0.0
    %815 = vmatprep.subr.mxu0 0.0
    %816 = vmatpush2.msra.mxu0 0.0
    %817 = vmatprep.subr.mxu0 0.0
    %818 = vmatpush2.msra.mxu0 0.0
    %819 = vmatprep.subr.mxu0 0.0
    %820 = vmatpush2.msra.mxu0 0.0
    %821 = vmatprep.subr.mxu0 0.0
    %822 = vmatpush2.msra.mxu0 0.0
    %823 = vmatprep.subr.mxu0 0.0
    %824 = vmatpush2.msra.mxu0 0.0
    %825 = vmatprep.subr.mxu0 0.0
    %826 = vmatpush2.msra.mxu0 0.0
    %827 = vmatprep.subr.mxu0 0.0
    %828 = vmatpush2.msra.mxu0 0.0
    %829 = vmatprep.subr.mxu0 0.0
    %830 = vmatpush2.msra.mxu0 0.0
    %831 = vmatprep.subr.mxu0 0.0
    %832 = vmatpush2.msra.mxu0 0.0
    %833 = vmatprep.subr.mxu0 0.0
    %834 = vmatpush2.msra.mxu0 0.0
    %835 = vmatprep.subr.mxu0 0.0
    %836 = vmatpush2.msra.mxu0 0.0
    %837 = vmatprep.mubr.f32.mxu0 0.0
    %838 = vmatmul.mubr.f32.gmra.mxu0 %v701
    %v839 = vpop.f32.mrf.mxu0
    %v840 = vadd.f32 0.0, %v839
    %v841 = vpop.f32.mrf.mxu0
    %842 = vdwg.mxu0
    %v843 = vmax.f32 %v770, 0.0
    %v844 = vmax.f32 %v840, 0.0
    %vm845 = vcmask 15360
    %v847 = vsel %vm845, %v696, 0
    %v850 = vsel %vm845, %v697, 0
    %v853 = vsel %vm845, %v698, 0
    %v856 = vsel %vm845, %v699, 0
    %vm858 = vcmask 1041408
    %v860 = vsel %vm858, %v843, 0
    %862 = vmatprep.subr.mxu0 0.0
    %863 = vmatpush1.msra.mxu0 0.0
    %864 = vmatprep.subr.mxu0 0.0
    %865 = vmatpush1.msra.mxu0 0.0
    %866 = vmatprep.subr.mxu0 0.0
    %867 = vmatpush1.msra.mxu0 0.0
    %868 = vmatprep.subr.mxu0 0.0
    %869 = vmatpush1.msra.mxu0 0.0
    %870 = vmatprep.subr.mxu0 0.0
    %871 = vmatpush1.msra.mxu0 0.0
    %872 = vmatprep.subr.mxu0 0.0
    %873 = vmatpush1.msra.mxu0 0.0
    %874 = vmatprep.subr.mxu0 0.0
    %875 = vmatpush1.msra.mxu0 0.0
    %876 = vmatprep.subr.mxu0 0.0
    %877 = vmatpush1.msra.mxu0 0.0
    %878 = vmatprep.subr.mxu0 0.0
    %879 = vmatpush1.msra.mxu0 0.0
    %880 = vmatprep.subr.mxu0 0.0
    %881 = vmatpush1.msra.mxu0 0.0
    %882 = vmatprep.subr.mxu0 0.0
    %883 = vmatpush1.msra.mxu0 0.0
    %884 = vmatprep.subr.mxu0 0.0
    %885 = vmatpush1.msra.mxu0 0.0
    %886 = vmatprep.subr.mxu0 0.0
    %887 = vmatpush1.msra.mxu0 0.0
    %888 = vmatprep.subr.mxu0 0.0
    %889 = vmatpush1.msra.mxu0 0.0
    %890 = vmatprep.subr.mxu0 0.0
    %891 = vmatpush1.msra.mxu0 0.0
    %892 = vmatprep.subr.mxu0 0.0
    %893 = vmatpush1.msra.mxu0 %v860
    %894 = vmatprep.subr.mxu0 0.0
    %895 = vmatpush2.msra.mxu0 0.0
    %896 = vmatprep.subr.mxu0 0.0
    %897 = vmatpush2.msra.mxu0 0.0
    %898 = vmatprep.subr.mxu0 0.0
    %899 = vmatpush2.msra.mxu0 0.0
    %900 = vmatprep.subr.mxu0 0.0
    %901 = vmatpush2.msra.mxu0 0.0
    %902 = vmatprep.subr.mxu0 0.0
    %903 = vmatpush2.msra.mxu0 0.0
    %904 = vmatprep.subr.mxu0 0.0
    %905 = vmatpush2.msra.mxu0 0.0
    %906 = vmatprep.subr.mxu0 0.0
    %907 = vmatpush2.msra.mxu0 0.0
    %908 = vmatprep.subr.mxu0 0.0
    %909 = vmatpush2.msra.mxu0 0.0
    %910 = vmatprep.subr.mxu0 0.0
    %911 = vmatpush2.msra.mxu0 0.0
    %912 = vmatprep.subr.mxu0 0.0
    %913 = vmatpush2.msra.mxu0 0.0
    %914 = vmatprep.subr.mxu0 0.0
    %915 = vmatpush2.msra.mxu0 0.0
    %916 = vmatprep.subr.mxu0 0.0
    %917 = vmatpush2.msra.mxu0 0.0
    %918 = vmatprep.subr.mxu0 0.0
    %919 = vmatpush2.msra.mxu0 0.0
    %920 = vmatprep.subr.mxu0 0.0
    %921 = vmatpush2.msra.mxu0 0.0
    %922 = vmatprep.subr.mxu0 0.0
    %923 = vmatpush2.msra.mxu0 0.0
    %924 = vmatprep.subr.mxu0 0.0
    %925 = vmatpush2.msra.mxu0 0.0
    %926 = vmatprep.mubr.f32.mxu0 0.0
    %927 = vmatmul.mubr.f32.gmra.mxu0 %v847
    %v928 = vpop.f32.mrf.mxu0
    %v929 = vadd.f32 0.0, %v928
    %v930 = vpop.f32.mrf.mxu0
    %931 = vmatprep.mubr.f32.mxu0 0.0
    %932 = vmatmul.mubr.f32.gmra.mxu0 %v850
    %v933 = vpop.f32.mrf.mxu0
    %v934 = vadd.f32 0.0, %v933
    %v935 = vpop.f32.mrf.mxu0
    %936 = vmatprep.mubr.f32.mxu0 0.0
    %937 = vmatmul.mubr.f32.gmra.mxu0 %v853
    %v938 = vpop.f32.mrf.mxu0
    %v939 = vadd.f32 0.0, %v938
    %v940 = vpop.f32.mrf.mxu0
    %941 = vmatprep.mubr.f32.mxu0 0.0
    %942 = vmatmul.mubr.f32.gmra.mxu0 %v856
    %v943 = vpop.f32.mrf.mxu0
    %v944 = vadd.f32 0.0, %v943
    %v945 = vpop.f32.mrf.mxu0
    %946 = vdwg.mxu0
    %v948 = vsel %vm858, %v844, 0
    %950 = vmatprep.subr.mxu0 0.0
    %951 = vmatpush1.msra.mxu0 0.0
    %952 = vmatprep.subr.mxu0 0.0
    %953 = vmatpush1.msra.mxu0 0.0
    %954 = vmatprep.subr.mxu0 0.0
    %955 = vmatpush1.msra.mxu0 0.0
    %956 = vmatprep.subr.mxu0 0.0
    %957 = vmatpush1.msra.mxu0 0.0
    %958 = vmatprep.subr.mxu0 0.0
    %959 = vmatpush1.msra.mxu0 0.0
    %960 = vmatprep.subr.mxu0 0.0
    %961 = vmatpush1.msra.mxu0 0.0
    %962 = vmatprep.subr.mxu0 0.0
    %963 = vmatpush1.msra.mxu0 0.0
    %964 = vmatprep.subr.mxu0 0.0
    %965 = vmatpush1.msra.mxu0 0.0
    %966 = vmatprep.subr.mxu0 0.0
    %967 = vmatpush1.msra.mxu0 0.0
    %968 = vmatprep.subr.mxu0 0.0
    %969 = vmatpush1.msra.mxu0 0.0
    %970 = vmatprep.subr.mxu0 0.0
    %971 = vmatpush1.msra.mxu0 0.0
    %972 = vmatprep.subr.mxu0 0.0
    %973 = vmatpush1.msra.mxu0 0.0
    %974 = vmatprep.subr.mxu0 0.0
    %975 = vmatpush1.msra.mxu0 0.0
    %976 = vmatprep.subr.mxu0 0.0
    %977 = vmatpush1.msra.mxu0 0.0
    %978 = vmatprep.subr.mxu0 0.0
    %979 = vmatpush1.msra.mxu0 0.0
    %980 = vmatprep.subr.mxu0 0.0
    %981 = vmatpush1.msra.mxu0 %v948
    %982 = vmatprep.subr.mxu0 0.0
    %983 = vmatpush2.msra.mxu0 0.0
    %984 = vmatprep.subr.mxu0 0.0
    %985 = vmatpush2.msra.mxu0 0.0
    %986 = vmatprep.subr.mxu0 0.0
    %987 = vmatpush2.msra.mxu0 0.0
    %988 = vmatprep.subr.mxu0 0.0
    %989 = vmatpush2.msra.mxu0 0.0
    %990 = vmatprep.subr.mxu0 0.0
    %991 = vmatpush2.msra.mxu0 0.0
    %992 = vmatprep.subr.mxu0 0.0
    %993 = vmatpush2.msra.mxu0 0.0
    %994 = vmatprep.subr.mxu0 0.0
    %995 = vmatpush2.msra.mxu0 0.0
    %996 = vmatprep.subr.mxu0 0.0
    %997 = vmatpush2.msra.mxu0 0.0
    %998 = vmatprep.subr.mxu0 0.0
    %999 = vmatpush2.msra.mxu0 0.0
    %1000 = vmatprep.subr.mxu0 0.0
    %1001 = vmatpush2.msra.mxu0 0.0
    %1002 = vmatprep.subr.mxu0 0.0
    %1003 = vmatpush2.msra.mxu0 0.0
    %1004 = vmatprep.subr.mxu0 0.0
    %1005 = vmatpush2.msra.mxu0 0.0
    %1006 = vmatprep.subr.mxu0 0.0
    %1007 = vmatpush2.msra.mxu0 0.0
    %1008 = vmatprep.subr.mxu0 0.0
    %1009 = vmatpush2.msra.mxu0 0.0
    %1010 = vmatprep.subr.mxu0 0.0
    %1011 = vmatpush2.msra.mxu0 0.0
    %1012 = vmatprep.subr.mxu0 0.0
    %1013 = vmatpush2.msra.mxu0 0.0
    %1014 = vmatprep.mubr.f32.mxu0 0.0
    %1015 = vmatmul.mubr.f32.gmra.mxu0 %v847
    %v1016 = vpop.f32.mrf.mxu0
    %v1017 = vadd.f32 0.0, %v1016
    %v1018 = vpop.f32.mrf.mxu0
    %1019 = vmatprep.mubr.f32.mxu0 0.0
    %1020 = vmatmul.mubr.f32.gmra.mxu0 %v850
    %v1021 = vpop.f32.mrf.mxu0
    %v1022 = vadd.f32 0.0, %v1021
    %v1023 = vpop.f32.mrf.mxu0
    %1024 = vmatprep.mubr.f32.mxu0 0.0
    %1025 = vmatmul.mubr.f32.gmra.mxu0 %v853
    %v1026 = vpop.f32.mrf.mxu0
    %v1027 = vadd.f32 0.0, %v1026
    %v1028 = vpop.f32.mrf.mxu0
    %1029 = vmatprep.mubr.f32.mxu0 0.0
    %1030 = vmatmul.mubr.f32.gmra.mxu0 %v856
    %v1031 = vpop.f32.mrf.mxu0
    %v1032 = vadd.f32 0.0, %v1031
    %v1033 = vpop.f32.mrf.mxu0
    %1034 = vdwg.mxu0
    %v1035 = vxor.u32 %v929, 2147483648
    %v1036 = vxor.u32 %v934, 2147483648
    %v1037 = vxor.u32 %v939, 2147483648
    %v1038 = vxor.u32 %v944, 2147483648
    %v1039 = vxor.u32 %v1017, 2147483648
    %v1040 = vxor.u32 %v1022, 2147483648
    %v1041 = vxor.u32 %v1027, 2147483648
    %v1042 = vxor.u32 %v1032, 2147483648
    %v1043 = vmul.f32 %v1035, 1.442695
    %v1044 = vpow.pop %v1043
    %v1045 = vmul.f32 %v1036, 1.442695
    %v1046 = vpow.pop %v1045
    %v1047 = vmul.f32 %v1037, 1.442695
    %v1048 = vpow.pop %v1047
    %v1049 = vmul.f32 %v1038, 1.442695
    %v1050 = vpow.pop %v1049
    %v1051 = vmul.f32 %v1039, 1.442695
    %v1052 = vpow.pop %v1051
    %v1053 = vmul.f32 %v1040, 1.442695
    %v1054 = vpow.pop %v1053
    %v1055 = vmul.f32 %v1041, 1.442695
    %v1056 = vpow.pop %v1055
    %v1057 = vmul.f32 %v1042, 1.442695
    %v1058 = vpow.pop %v1057
    %v1059 = vadd.f32 %v1044, 1.0
    %v1060 = vadd.f32 %v1046, 1.0
    %v1061 = vadd.f32 %v1048, 1.0
    %v1062 = vadd.f32 %v1050, 1.0
    %v1063 = vadd.f32 %v1052, 1.0
    %v1064 = vadd.f32 %v1054, 1.0
    %v1065 = vadd.f32 %v1056, 1.0
    %v1066 = vadd.f32 %v1058, 1.0
    %v1067 = vrcp.pop %v1059
    %v1068 = vmul.f32 1.0, %v1067
    %v1069 = vrcp.pop %v1060
    %v1070 = vmul.f32 1.0, %v1069
    %v1071 = vrcp.pop %v1061
    %v1072 = vmul.f32 1.0, %v1071
    %v1073 = vrcp.pop %v1062
    %v1074 = vmul.f32 1.0, %v1073
    %v1075 = vrcp.pop %v1063
    %v1076 = vmul.f32 1.0, %v1075
    %v1077 = vrcp.pop %v1064
    %v1078 = vmul.f32 1.0, %v1077
    %v1079 = vrcp.pop %v1065
    %v1080 = vmul.f32 1.0, %v1079
    %v1081 = vrcp.pop %v1066
    %v1082 = vmul.f32 1.0, %v1081
    %v1083 = vmul.f32 %v659, %v1068
    %v1084 = vmul.f32 %v660, %v1070
    %v1085 = vmul.f32 %v661, %v1072
    %v1086 = vmul.f32 %v662, %v1074
    %v1087 = vmul.f32 %v659, %v1076
    %v1088 = vmul.f32 %v660, %v1078
    %v1089 = vmul.f32 %v661, %v1080
    %v1090 = vmul.f32 %v662, %v1082
    %v1091 = vmul.f32 %v671, %v1068
    %v1092 = vmul.f32 %v672, %v1070
    %v1093 = vmul.f32 %v673, %v1072
    %v1094 = vmul.f32 %v674, %v1074
    %v1095 = vmul.f32 %v671, %v1076
    %v1096 = vmul.f32 %v672, %v1078
    %v1097 = vmul.f32 %v673, %v1080
    %v1098 = vmul.f32 %v674, %v1082
    %1100 = vset.pattern.permute.xlu0 0
    %1101 = vperm.xlu0 %1100, %v1083
    %v1102 = vpop.permute.xlu0 %1101
    %1105 = vset.pattern.permute.xlu0 0
    %1106 = vperm.xlu0 %1105, %v1084
    %v1107 = vpop.permute.xlu0 %1106
    %1110 = vset.pattern.permute.xlu0 0
    %1111 = vperm.xlu0 %1110, %v1085
    %v1112 = vpop.permute.xlu0 %1111
    %1115 = vset.pattern.permute.xlu0 0
    %1116 = vperm.xlu0 %1115, %v1086
    %v1117 = vpop.permute.xlu0 %1116
    %1120 = vset.pattern.permute.xlu0 0
    %1121 = vperm.xlu0 %1120, %v1087
    %v1122 = vpop.permute.xlu0 %1121
    %1125 = vset.pattern.permute.xlu0 0
    %1126 = vperm.xlu0 %1125, %v1088
    %v1127 = vpop.permute.xlu0 %1126
    %1130 = vset.pattern.permute.xlu0 0
    %1131 = vperm.xlu0 %1130, %v1089
    %v1132 = vpop.permute.xlu0 %1131
    %1135 = vset.pattern.permute.xlu0 0
    %1136 = vperm.xlu0 %1135, %v1090
    %v1137 = vpop.permute.xlu0 %1136
    %v1139 = vmul.f32 %v480, %v1102
    %v1140 = vmul.f32 %v485, %v1107
    %v1141 = vmul.f32 %v490, %v1112
    %v1142 = vmul.f32 %v495, %v1117
    %v1143 = vmul.f32 %v565, %v1122
    %v1144 = vmul.f32 %v570, %v1127
    %v1145 = vmul.f32 %v575, %v1132
    %v1146 = vmul.f32 %v580, %v1137
    %1148 = vset.pattern.permute.xlu0 0
    %1149 = vperm.xlu0 %1148, %v1091
    %v1150 = vpop.permute.xlu0 %1149
    %1153 = vset.pattern.permute.xlu0 0
    %1154 = vperm.xlu0 %1153, %v1092
    %v1155 = vpop.permute.xlu0 %1154
    %1158 = vset.pattern.permute.xlu0 0
    %1159 = vperm.xlu0 %1158, %v1093
    %v1160 = vpop.permute.xlu0 %1159
    %1163 = vset.pattern.permute.xlu0 0
    %1164 = vperm.xlu0 %1163, %v1094
    %v1165 = vpop.permute.xlu0 %1164
    %1168 = vset.pattern.permute.xlu0 0
    %1169 = vperm.xlu0 %1168, %v1095
    %v1170 = vpop.permute.xlu0 %1169
    %1173 = vset.pattern.permute.xlu0 0
    %1174 = vperm.xlu0 %1173, %v1096
    %v1175 = vpop.permute.xlu0 %1174
    %1178 = vset.pattern.permute.xlu0 0
    %1179 = vperm.xlu0 %1178, %v1097
    %v1180 = vpop.permute.xlu0 %1179
    %1183 = vset.pattern.permute.xlu0 0
    %1184 = vperm.xlu0 %1183, %v1098
    %v1185 = vpop.permute.xlu0 %1184
    %v1187 = vadd.f32 %v1139, %v1150
    %v1188 = vadd.f32 %v1140, %v1155
    %v1189 = vadd.f32 %v1141, %v1160
    %v1190 = vadd.f32 %v1142, %v1165
    %v1191 = vadd.f32 %v1143, %v1170
    %v1192 = vadd.f32 %v1144, %v1175
    %v1193 = vadd.f32 %v1145, %v1180
    %v1194 = vadd.f32 %v1146, %v1185
    %v1195 = vadd.f32 %v1187, %v33
    %v1196 = vadd.f32 %v1188, %v34
    %v1197 = vadd.f32 %v1189, %v35
    %v1198 = vadd.f32 %v1190, %v36
    %v1199 = vadd.f32 %v1191, %v37
    %v1200 = vadd.f32 %v1192, %v38
    %v1201 = vadd.f32 %v1193, %v39
    %v1202 = vadd.f32 %v1194, %v40
    %v1203 = vmax.f32 %v1195, 0.0
    %v1204 = vmax.f32 %v1196, 0.0
    %v1205 = vmax.f32 %v1197, 0.0
    %v1206 = vmax.f32 %v1198, 0.0
    %v1207 = vmax.f32 %v1199, 0.0
    %v1208 = vmax.f32 %v1200, 0.0
    %v1209 = vmax.f32 %v1201, 0.0
    %v1210 = vmax.f32 %v1202, 0.0
    %1211 = vst [vmem:[#allocation2] sm:$0xff] %v1203
    %1212 = vst [vmem:[#allocation2 + $0x8] sm:$0xff] %v1204
    %1213 = vst [vmem:[#allocation2 + $0x10] sm:$0xff] %v1205
    %1214 = vst [vmem:[#allocation2 + $0x18] sm:$0xff] %v1206
    %1215 = vst [vmem:[#allocation2 + $0x20] sm:$0xff] %v1207
    %1216 = vst [vmem:[#allocation2 + $0x28] sm:$0xff] %v1208
    %1217 = vst [vmem:[#allocation2 + $0x30] sm:$0xff] %v1209
    %1218 = vst [vmem:[#allocation2 + $0x38] sm:$0xff] %v1210
    // Predicated region
    $region38: #{tpu_custom_call.1} parent=1 // pred_check
      _
    $region39: #{tpu_custom_call.1} parent=1 // pred_check_branch
      %1220 = sbr.rel (0) target = $region41
    $region40: #{tpu_custom_call.1} parent=1 // pred_region
      %s1222 = ssub.s32 1024, 1024
      %1223 = vsyncadd [#allocation3], %s1222
      %s1224 = sshll.u32 [#allocation2], 4
      %s1225 = int_to_ptr.vmem [resolvable:$true] %s1224
      %1230 = dma.vmem_to_hbm [thread:$0]  %s1225, 1024, %s9, [#allocation3], 128, 128, 8
    $region41: #{tpu_custom_call.1} parent=1 // pred_fallthru
      _
    // Predicated region
    $region42: #{tpu_custom_call.1} parent=1 // pred_check
      _
    $region43: #{tpu_custom_call.1} parent=1 // pred_check_branch
      %1232 = sbr.rel (0) target = $region45
    $region44: #{tpu_custom_call.1} parent=1 // pred_region
      %1233 = dma.done [#allocation3], 1024
    $region45: #{tpu_custom_call.1} parent=1 // pred_fallthru
      _
    %1234 = vsyncpa [#allocation3], 1

</llo_original>
